<compile_context>
chip_gen: v5e
topology: v5e:2x2
jax: 0.10.0
libtpu: 0.0.40
codegen_flags: <defaults>
</compile_context>

<pallas_src>
import math

import jax
import jax.numpy as jnp
from jax import lax
from jax.experimental import pallas as pl
from jax.experimental.pallas import tpu as pltpu

IN_FEATURES = 10
OUT_FEATURES = 1


def _round_up(a: int, b: int) -> int:
    return pl.cdiv(a, b) * b


def linear_kernel(w_ref, b_ref, x_ref, o_ref):
    """y[r, 0] = sum_k x[r, k] * w[0, k] + b   for every row r of the tile.

    w_ref: VMEM (1, IN)   f32  -- nn.Linear weight row
    b_ref: SMEM (1,)      f32  -- nn.Linear bias
    x_ref: VMEM (TB, IN)  f32  -- input tile, native (batch, features) layout
    o_ref: VMEM (TB, 1)   f32  -- output tile
    """
    w = w_ref[...]                       # (1, IN): load/broadcast once per tile
    b = b_ref[0]
    tb = x_ref.shape[0]

    # Strip-mine rows so the (chunk, IN) product never holds hundreds of vregs
    # live across the reduction (512 rows x 128 padded lanes of f32 streams
    # comfortably through the 64-vreg file without spills).
    chunk = math.gcd(tb, 512)
    n_chunks = tb // chunk

    def body(i, carry):
        r0 = pl.multiple_of(i * chunk, chunk)
        xc = x_ref[pl.ds(r0, chunk), :]                       # (chunk, IN)
        # Full-vreg VPU multiply; the 10-wide reduction goes to the XLU slot.
        yc = jnp.sum(xc * w, axis=1, keepdims=True) + b       # (chunk, 1) f32
        o_ref[pl.ds(r0, chunk), :] = yc.astype(o_ref.dtype)
        return carry

    lax.fori_loop(0, n_chunks, body, 0)


def dummy_model_forward(x, weight, bias, *, batch_tile=16384):
    """y = x @ weight.T + bias   (PyTorch nn.Linear(10, 1) forward).

    x:      (B, 10) float32
    weight: (1, 10) float32  (PyTorch (out_features, in_features) layout)
    bias:   (1,)    float32
    returns (B, 1)  float32
    """
    B, IN = x.shape
    OUT = weight.shape[0]
    assert IN == IN_FEATURES and OUT == OUT_FEATURES, "DummyModel is nn.Linear(10, 1)"

    # Native-layout tiling: no transpose, no batch padding.  Tile rows are a
    # multiple of 8 (sublane constraint); uneven grids leave a masked partial
    # last block.  tb=16384 rows -> ~0.7 MB HBM payload per grid step, ~32 MiB
    # double-buffered VMEM (fits v7x's 64 MiB; trivial on v5e/v6e's 128 MiB).
    tb = min(batch_tile, _round_up(B, 8))
    # v7x has 2 TensorCores: keep at least two grid steps when there is enough
    # work so the second core is not idle (harmless on 1-TC v5e/v6e).
    if B > 4096 and pl.cdiv(B, tb) < 2:
        tb = _round_up(pl.cdiv(B, 2), 512)
    n_tiles = pl.cdiv(B, tb)

    w_row = weight.reshape(1, IN).astype(jnp.float32)    # (1, IN) -> VMEM
    b_vec = bias.reshape(OUT).astype(jnp.float32)        # (1,)    -> SMEM

    y = pl.pallas_call(
        linear_kernel,
        out_shape=jax.ShapeDtypeStruct((B, OUT), x.dtype),
        grid=(n_tiles,),
        in_specs=[
            pl.BlockSpec((1, IN), lambda i: (0, 0)),               # weight
            pl.BlockSpec(memory_space=pltpu.MemorySpace.SMEM),     # bias
            pl.BlockSpec((tb, IN), lambda i: (i, 0)),              # x tile
        ],
        out_specs=pl.BlockSpec((tb, OUT), lambda i: (i, 0)),
        compiler_params=pltpu.CompilerParams(
            dimension_semantics=("parallel",),
            vmem_limit_bytes=48 * 1024 * 1024,
        ),
    )(w_row, b_vec, x.astype(jnp.float32))

    return y


if __name__ == "__main__":
    key = jax.random.PRNGKey(0)
    k_x, k_w, k_b, k_x2 = jax.random.split(key, 4)

    B, IN, OUT = 8, IN_FEATURES, OUT_FEATURES

    # Deterministic parameters (mimic PyTorch's U(-1/sqrt(in), 1/sqrt(in)) init).
    bound = 1.0 / jnp.sqrt(jnp.float32(IN))
    weight = jax.random.uniform(k_w, (OUT, IN), jnp.float32, -bound, bound)
    bias = jax.random.uniform(k_b, (OUT,), jnp.float32, -bound, bound)

    # Small-shape run (matches DummyModel's test usage): single full tile.
    x = jax.random.normal(k_x, (B, IN), jnp.float32)
    y = dummy_model_forward(x, weight, bias)
    jax.block_until_ready(y)
    y_ref = x @ weight.T + bias
    assert y.shape == (B, OUT)
    assert jnp.allclose(y, y_ref, atol=1e-5, rtol=1e-5)

    # Exercise the multi-tile + partial-last-block path (uneven grid, no pad).
    B2 = 300
    x2 = jax.random.normal(k_x2, (B2, IN), jnp.float32)
    y2 = dummy_model_forward(x2, weight, bias, batch_tile=128)
    jax.block_until_ready(y2)
    y2_ref = x2 @ weight.T + bias
    assert y2.shape == (B2, OUT)
    assert jnp.allclose(y2, y2_ref, atol=1e-5, rtol=1e-5)

    print("KERNEL_OK")
</pallas_src>

<mosaic_0001>
module attributes {stable_mosaic.version = 11 : i64} {
  func.func @linear_kernel(%arg0: i32, %arg1: memref<1x10xf32, #tpu.memory_space<vmem>>, %arg2: memref<1xf32, #tpu.memory_space<smem>>, %arg3: memref<8x10xf32, #tpu.memory_space<vmem>>, %arg4: memref<8x1xf32, #tpu.memory_space<vmem>>) attributes {dimension_semantics = [#tpu.dimension_semantics<parallel>], iteration_bounds = array<i64: 1>, scalar_prefetch = 0 : i64, scratch_operands = 0 : i64, tpu.core_type = #tpu.core_type<tc>, window_params = [{pipeline_mode = #tpu.pipeline_mode<synchronous>, transform_indices = @transform_0, window_bounds = array<i64: 1, 10>}, {transform_indices = @transform_1, window_bounds = array<i64: 1>}, {transform_indices = @transform_2, window_bounds = array<i64: 8, 10>}, {transform_indices = @transform_3, window_bounds = array<i64: 8, 1>}]} {
    %c0 = arith.constant 0 : index
    %c0_0 = arith.constant 0 : index
    %0 = vector.load %arg1[%c0, %c0_0] : memref<1x10xf32, #tpu.memory_space<vmem>>, vector<1x10xf32>
    %c0_1 = arith.constant 0 : index
    %1 = memref.load %arg2[%c0_1] : memref<1xf32, #tpu.memory_space<smem>>
    %c0_i32 = arith.constant 0 : i32
    %c8_i32 = arith.constant 8 : i32
    %2 = arith.muli %c0_i32, %c8_i32 : i32
    %3 = tpu.assume_multiple %2, 8 : i32
    %4 = arith.index_cast %3 : i32 to index
    %c0_2 = arith.constant 0 : index
    %5 = vector.load %arg3[%4, %c0_2] : memref<8x10xf32, #tpu.memory_space<vmem>>, vector<8x10xf32>
    %6 = vector.broadcast %0 : vector<1x10xf32> to vector<8x10xf32>
    %7 = arith.mulf %5, %6 : vector<8x10xf32>
    %cst = arith.constant dense<0.000000e+00> : vector<8xf32>
    %8 = vector.multi_reduction <add>, %7, %cst [1] : vector<8x10xf32> to vector<8xf32>
    %9 = vector.shape_cast %8 : vector<8xf32> to vector<8x1xf32>
    %10 = vector.broadcast %1 : f32 to vector<8x1xf32>
    %11 = arith.addf %9, %10 : vector<8x1xf32>
    %12 = arith.index_cast %3 : i32 to index
    %c0_3 = arith.constant 0 : index
    %13 = vector.load %arg4[%12, %c0_3] : memref<8x1xf32, #tpu.memory_space<vmem>>, vector<8x1xf32>
    tpu.vector_store %arg4[%12, %c0_3], %11 {strides = array<i32>} : memref<8x1xf32, #tpu.memory_space<vmem>>, vector<8x1xf32>,
    %c1_i32 = arith.constant 1 : i32
    return
  }
  func.func @transform_0(%arg0: i32) -> (i32, i32) {
    %c0_i32 = arith.constant 0 : i32
    %c0_i32_0 = arith.constant 0 : i32
    %c0_i32_1 = arith.constant 0 : i32
    return %c0_i32, %c0_i32_0 : i32, i32
  }
  func.func @transform_1(%arg0: i32) -> i32 {
    %c0_i32 = arith.constant 0 : i32
    %c0_i32_0 = arith.constant 0 : i32
    return %c0_i32 : i32
  }
  func.func @transform_2(%arg0: i32) -> (i32, i32) {
    %c0_i32 = arith.constant 0 : i32
    %c0_i32_0 = arith.constant 0 : i32
    return %arg0, %c0_i32 : i32, i32
  }
  func.func @transform_3(%arg0: i32) -> (i32, i32) {
    %c0_i32 = arith.constant 0 : i32
    %c0_i32_0 = arith.constant 0 : i32
    return %arg0, %c0_i32 : i32, i32
  }
}

</mosaic_0001>

<llo_original>
// kernel: tpu_custom_call.1
$region0: #{tpu_custom_call.1}
  #allocation0 [shape = 'u32[]', space=smem, size = 0x4, offset = 0x4, fixed_abs, tag = 'smem constant byte address 0x4 - core index']
  #allocation1 [shape = 'u32[72,128]{1,0:T(1,128)}', space=vmem, size = 0x9000, scoped, tag = 'internal scratch']
  #allocation2 [shape = 'f32[1]{0:T(128)S(6)}', space=smem, size = 0x200, scoped, tag = 'scoped memory for tpu_custom_call.1']
  %s0 = inlined_call_operand.vmem [shape: f32[1,10], index: 0, kind: input, shape index: {}]
  %s1 = inlined_call_operand.<no memory space> [shape: f32[1], index: 1, kind: input, shape index: {}]
  %s2 = inlined_call_operand.hbm [shape: f32[8,10], index: 2, kind: input, shape index: {}]
  %s3 = inlined_call_operand.vmem [shape: f32[8,1], index: 3, kind: output, shape index: {}]
  %s4 = sld [smem:[#allocation0]]
  $region26: #{tpu_custom_call.1} parent=0
    _
  %s6 = ssub.s32 1, %s4
  %s7 = scalar_select 0, %s6, %s4
  %8 = sst [smem:[#allocation2]] %s1
  $region1: #{tpu_custom_call.1} parent=0
    #allocation3 [shape = 'u8[4096]{0}', space=vmem, size = 0x1000, scoped, tag = 'input window, operand 2, single buffered']
    #allocation4 [shape = 's32[1]{0}', space=sflag, size = 0x4, scoped, tag = 'scoped memory for tpu_custom_call.1']
    %9 = vsyncpa [#allocation4], 0
    // Predicated region
    $region2: #{tpu_custom_call.1} parent=1 // pred_check
      _
    $region3: #{tpu_custom_call.1} parent=1 // pred_check_branch
      %11 = sbr.rel (0) target = $region5
    $region4: #{tpu_custom_call.1} parent=1 // pred_region
      _
    $region5: #{tpu_custom_call.1} parent=1 // pred_fallthru
      _
    // Predicated region
    $region6: #{tpu_custom_call.1} parent=1 // pred_check
      _
    $region7: #{tpu_custom_call.1} parent=1 // pred_check_branch
      %13 = sbr.rel (0) target = $region9
    $region8: #{tpu_custom_call.1} parent=1 // pred_region
      _
    $region9: #{tpu_custom_call.1} parent=1 // pred_fallthru
      _
    // Predicated region
    $region10: #{tpu_custom_call.1} parent=1 // pred_check
      _
    $region11: #{tpu_custom_call.1} parent=1 // pred_check_branch
      %15 = sbr.rel (0) target = $region13
    $region12: #{tpu_custom_call.1} parent=1 // pred_region
      %17 = vsyncadd [#allocation4], 0
      %s19 = sshll.u32 %s2, 4
      %s20 = int_to_ptr.hbm [resolvable:$true] %s19
      %s21 = sshll.u32 [#allocation3], 4
      %s22 = int_to_ptr.vmem [resolvable:$true] %s21
      %24 = dma.hbm_to_vmem [thread:$0]  %s20, 128, %s22, [#allocation4]
    $region13: #{tpu_custom_call.1} parent=1 // pred_fallthru
      _
    // Predicated region
    $region14: #{tpu_custom_call.1} parent=1 // pred_check
      _
    $region15: #{tpu_custom_call.1} parent=1 // pred_check_branch
      %26 = sbr.rel (0) target = $region17
    $region16: #{tpu_custom_call.1} parent=1 // pred_region
      %28 = dma.done [#allocation4], 128
    $region17: #{tpu_custom_call.1} parent=1 // pred_fallthru
      _
    %v29 = vld [vmem:[%s0] sm:$0x1]
    %s30 = sld [smem:[#allocation2]]
    %v31 = vld [vmem:[#allocation3] sm:$0xff]
    %v33 = vperm.slane %v29, 0
    %v35 = vmul.f32 %v31, %v33
    %vm36 = vcmask 80896
    %v37 = vsel %vm36, %v35, 0.0
    %38 = vadd.xlane.f32.xlu0 %v37
    %v39 = vpop.xlane.xlu0 %38
    %v40 = vstv %s30
    %v41 = vadd.f32 %v39, %v40
    %vm42 = vcmask 7168
    %43 = vst.msk [vmem:[%s3] sm:$0xff] %vm42, %v41
    // Predicated region
    $region18: #{tpu_custom_call.1} parent=1 // pred_check
      _
    $region19: #{tpu_custom_call.1} parent=1 // pred_check_branch
      %45 = sbr.rel (0) target = $region21
    $region20: #{tpu_custom_call.1} parent=1 // pred_region
      _
    $region21: #{tpu_custom_call.1} parent=1 // pred_fallthru
      _
    // Predicated region
    $region22: #{tpu_custom_call.1} parent=1 // pred_check
      _
    $region23: #{tpu_custom_call.1} parent=1 // pred_check_branch
      %47 = sbr.rel (0) target = $region25
    $region24: #{tpu_custom_call.1} parent=1 // pred_region
      _
    $region25: #{tpu_custom_call.1} parent=1 // pred_fallthru
      _
    %48 = vsyncpa [#allocation4], 1

</llo_original>
